<compile_context>
chip_gen: v5e
topology: v5e:2x2
jax: 0.10.0
libtpu: 0.0.40
codegen_flags: <defaults>
</compile_context>

<pallas_src>
import functools

import jax
import jax.numpy as jnp
from jax.experimental import pallas as pl
from jax.experimental.pallas import tpu as pltpu


def _r8(n: int) -> int:
    return ((n + 7) // 8) * 8


# ----------------------------------------------------------------------------
# Kernel
# ----------------------------------------------------------------------------
def _make_critic_kernel(dx: int, dy: int, h: int):
    # Row offsets inside the packed parameter buffer (each segment 8-aligned).
    r_w1x = 0
    r_w1y = _r8(dx)
    r_w2 = r_w1y + _r8(dy)
    r_tail = r_w2 + _r8(h)
    r_w3, r_b1, r_b2, r_b3 = r_tail, r_tail + 1, r_tail + 2, r_tail + 3

    def kernel(x_ref, y_ref, p_ref, o_ref):
        # Static slices into the single packed parameter block (VMEM-resident
        # across the whole batch grid).
        w1x = p_ref[r_w1x:r_w1x + dx, :]   # (Dx, H)
        w1y = p_ref[r_w1y:r_w1y + dy, :]   # (Dy, H)
        w2 = p_ref[r_w2:r_w2 + h, :]       # (H, H)
        w3 = p_ref[r_w3:r_w3 + 1, :]       # (1, H)  == W3.T
        b1 = p_ref[r_b1:r_b1 + 1, :]       # (1, H)
        b2 = p_ref[r_b2:r_b2 + 1, :]       # (1, H)
        b3 = p_ref[r_b3:r_b3 + 1, :]       # (1, H)  (scalar broadcast in row)

        # fc1 + ReLU (concat fused as two matmuls on the same accumulator)
        h1 = jnp.dot(x_ref[...], w1x, preferred_element_type=jnp.float32)
        h1 = h1 + jnp.dot(y_ref[...], w1y, preferred_element_type=jnp.float32)
        h1 = jnp.maximum(h1 + b1, 0.0)

        # fc2 + ReLU
        h2 = jnp.dot(h1, w2, preferred_element_type=jnp.float32)
        h2 = jnp.maximum(h2 + b2, 0.0)

        # fc3: N=1, so use VPU multiply + lane reduction instead of the MXU.
        q = jnp.sum(h2 * w3, axis=-1, keepdims=True) + b3[:, :1]
        o_ref[...] = q.astype(o_ref.dtype)

    return kernel


# ----------------------------------------------------------------------------
# Wrapper
# ----------------------------------------------------------------------------
@functools.partial(jax.jit, static_argnames=("tb",))
def critic_forward(x, y, packed_params, tb=None):
    """x: (B, Dx), y: (B, Dy), packed_params: (R, H)  ->  q: (B, 1)."""
    B, dx = x.shape
    dy = y.shape[1]
    R, h = packed_params.shape

    if tb is None:
        tb = max(8, min(512, _r8(B)))      # batch tile (multiple of 8)
    b_pad = ((B + tb - 1) // tb) * tb
    if b_pad != B:
        x = jnp.pad(x, ((0, b_pad - B), (0, 0)))
        y = jnp.pad(y, ((0, b_pad - B), (0, 0)))

    kernel = _make_critic_kernel(dx, dy, h)

    out = pl.pallas_call(
        kernel,
        out_shape=jax.ShapeDtypeStruct((b_pad, 1), jnp.float32),
        grid_spec=pltpu.PrefetchScalarGridSpec(
            num_scalar_prefetch=0,
            grid=(b_pad // tb,),
            in_specs=[
                pl.BlockSpec((tb, dx), lambda i: (i, 0)),   # x tile
                pl.BlockSpec((tb, dy), lambda i: (i, 0)),   # y tile
                pl.BlockSpec((R, h), lambda i: (0, 0)),     # packed weights (resident)
            ],
            out_specs=pl.BlockSpec((tb, 1), lambda i: (i, 0)),
        ),
        compiler_params=pltpu.CompilerParams(
            dimension_semantics=("parallel",),              # megacore on v7x
        ),
    )(x, y, packed_params)

    return out[:B]


# ----------------------------------------------------------------------------
# Parameter init / packing / reference
# ----------------------------------------------------------------------------
def init_critic_params(key, input_size, hidden):
    """Deterministic init mimicking nn.Linear default: U(-1/sqrt(fan_in), +)."""
    def linear(key, fan_in, fan_out):
        kw, kb = jax.random.split(key)
        bound = 1.0 / jnp.sqrt(float(fan_in))
        # Stored as (in, out) so the math is  x @ W + b.
        w = jax.random.uniform(kw, (fan_in, fan_out), jnp.float32, -bound, bound)
        b = jax.random.uniform(kb, (1, fan_out), jnp.float32, -bound, bound)
        return w, b

    k1, k2, k3 = jax.random.split(key, 3)
    w1, b1 = linear(k1, input_size, hidden)
    w2, b2 = linear(k2, hidden, hidden)
    w3, b3 = linear(k3, hidden, 1)
    return (w1, b1, w2, b2, w3, b3)


def pack_critic_params(params, dx, dy):
    """Pack (w1,b1,w2,b2,w3,b3) into one (R, H) f32 buffer, segments 8-aligned."""
    w1, b1, w2, b2, w3, b3 = params
    h = w1.shape[1]
    R = _r8(dx) + _r8(dy) + _r8(h) + 8
    P = jnp.zeros((R, h), jnp.float32)

    o = 0
    P = P.at[o:o + dx, :].set(w1[:dx, :])          # W1x
    o = _r8(dx)
    P = P.at[o:o + dy, :].set(w1[dx:dx + dy, :])   # W1y
    o += _r8(dy)
    P = P.at[o:o + h, :].set(w2)                   # W2
    o += _r8(h)
    P = P.at[o + 0, :].set(w3[:, 0])               # W3 as a row
    P = P.at[o + 1, :].set(b1[0])                  # b1
    P = P.at[o + 2, :].set(b2[0])                  # b2
    P = P.at[o + 3, :].set(jnp.full((h,), b3[0, 0]))  # b3 broadcast into a row
    return P


def critic_reference(x, y, params):
    w1, b1, w2, b2, w3, b3 = params
    xy = jnp.concatenate([x, y], axis=1)
    h1 = jnp.maximum(xy @ w1 + b1, 0.0)
    h2 = jnp.maximum(h1 @ w2 + b2, 0.0)
    return h2 @ w3 + b3


# ----------------------------------------------------------------------------
# Test
# ----------------------------------------------------------------------------
if __name__ == "__main__":
    key = jax.random.PRNGKey(0)
    k_params, k_x, k_y, k_x2, k_y2 = jax.random.split(key, 5)

    batch = 8
    state_dim = 12   # x features
    action_dim = 4   # y features
    input_size = state_dim + action_dim
    hidden = 32

    params = init_critic_params(k_params, input_size, hidden)
    packed = pack_critic_params(params, state_dim, action_dim)

    x = jax.random.normal(k_x, (batch, state_dim), jnp.float32)
    y = jax.random.normal(k_y, (batch, action_dim), jnp.float32)

    q = critic_forward(x, y, packed)
    q = jax.block_until_ready(q)

    q_ref = critic_reference(x, y, params)
    assert q.shape == (batch, 1)
    assert jnp.allclose(q, q_ref, atol=1e-4, rtol=1e-4)

    # Second check: batch not a multiple of 8 exercises the pad/slice path.
    x2 = jax.random.normal(k_x2, (20, state_dim), jnp.float32)
    y2 = jax.random.normal(k_y2, (20, action_dim), jnp.float32)
    q2 = jax.block_until_ready(critic_forward(x2, y2, packed))
    q2_ref = critic_reference(x2, y2, params)
    assert q2.shape == (20, 1)
    assert jnp.allclose(q2, q2_ref, atol=1e-4, rtol=1e-4)

    print("KERNEL_OK")
</pallas_src>

<mosaic_0001>
module attributes {stable_mosaic.version = 11 : i64} {
  func.func @kernel(%arg0: i32, %arg1: memref<8x12xf32, #tpu.memory_space<vmem>>, %arg2: memref<8x4xf32, #tpu.memory_space<vmem>>, %arg3: memref<64x32xf32, #tpu.memory_space<vmem>>, %arg4: memref<8x1xf32, #tpu.memory_space<vmem>>) attributes {dimension_semantics = [#tpu.dimension_semantics<parallel>], iteration_bounds = array<i64: 1>, scalar_prefetch = 0 : i64, scratch_operands = 0 : i64, tpu.core_type = #tpu.core_type<tc>, window_params = [{transform_indices = @transform_0, window_bounds = array<i64: 8, 12>}, {transform_indices = @transform_1, window_bounds = array<i64: 8, 4>}, {pipeline_mode = #tpu.pipeline_mode<synchronous>, transform_indices = @transform_2, window_bounds = array<i64: 64, 32>}, {transform_indices = @transform_3, window_bounds = array<i64: 8, 1>}]} {
    %c0 = arith.constant 0 : index
    %c0_0 = arith.constant 0 : index
    %0 = vector.load %arg3[%c0, %c0_0] : memref<64x32xf32, #tpu.memory_space<vmem>>, vector<12x32xf32>
    %c16 = arith.constant 16 : index
    %c0_1 = arith.constant 0 : index
    %1 = vector.load %arg3[%c16, %c0_1] : memref<64x32xf32, #tpu.memory_space<vmem>>, vector<4x32xf32>
    %c24 = arith.constant 24 : index
    %c0_2 = arith.constant 0 : index
    %2 = vector.load %arg3[%c24, %c0_2] : memref<64x32xf32, #tpu.memory_space<vmem>>, vector<32x32xf32>
    %c56 = arith.constant 56 : index
    %c0_3 = arith.constant 0 : index
    %3 = vector.load %arg3[%c56, %c0_3] : memref<64x32xf32, #tpu.memory_space<vmem>>, vector<1x32xf32>
    %c57 = arith.constant 57 : index
    %c0_4 = arith.constant 0 : index
    %4 = vector.load %arg3[%c57, %c0_4] : memref<64x32xf32, #tpu.memory_space<vmem>>, vector<1x32xf32>
    %c58 = arith.constant 58 : index
    %c0_5 = arith.constant 0 : index
    %5 = vector.load %arg3[%c58, %c0_5] : memref<64x32xf32, #tpu.memory_space<vmem>>, vector<1x32xf32>
    %c59 = arith.constant 59 : index
    %c0_6 = arith.constant 0 : index
    %6 = vector.load %arg3[%c59, %c0_6] : memref<64x32xf32, #tpu.memory_space<vmem>>, vector<1x32xf32>
    %c0_7 = arith.constant 0 : index
    %c0_8 = arith.constant 0 : index
    %7 = vector.load %arg1[%c0_7, %c0_8] : memref<8x12xf32, #tpu.memory_space<vmem>>, vector<8x12xf32>
    %cst = arith.constant dense<0.000000e+00> : vector<8x32xf32>
    %8 = tpu.matmul %7, %0, %cst {dimension_numbers = #tpu.dot_dimension_numbers<[1], [0], [0], [1], [0, 0, 1, 1], [], []>} : vector<8x12xf32>, vector<12x32xf32>, vector<8x32xf32> -> vector<8x32xf32>
    %c0_9 = arith.constant 0 : index
    %c0_10 = arith.constant 0 : index
    %9 = vector.load %arg2[%c0_9, %c0_10] : memref<8x4xf32, #tpu.memory_space<vmem>>, vector<8x4xf32>
    %cst_11 = arith.constant dense<0.000000e+00> : vector<8x32xf32>
    %10 = tpu.matmul %9, %1, %cst_11 {dimension_numbers = #tpu.dot_dimension_numbers<[1], [0], [0], [1], [0, 0, 1, 1], [], []>} : vector<8x4xf32>, vector<4x32xf32>, vector<8x32xf32> -> vector<8x32xf32>
    %11 = arith.addf %8, %10 : vector<8x32xf32>
    %12 = vector.broadcast %4 : vector<1x32xf32> to vector<8x32xf32>
    %13 = arith.addf %11, %12 : vector<8x32xf32>
    %cst_12 = arith.constant 0.000000e+00 : f32
    %14 = vector.broadcast %cst_12 : f32 to vector<8x32xf32>
    %15 = arith.maximumf %13, %14 : vector<8x32xf32>
    %cst_13 = arith.constant dense<0.000000e+00> : vector<8x32xf32>
    %16 = tpu.matmul %15, %2, %cst_13 {dimension_numbers = #tpu.dot_dimension_numbers<[1], [0], [0], [1], [0, 0, 1, 1], [], []>} : vector<8x32xf32>, vector<32x32xf32>, vector<8x32xf32> -> vector<8x32xf32>
    %17 = vector.broadcast %5 : vector<1x32xf32> to vector<8x32xf32>
    %18 = arith.addf %16, %17 : vector<8x32xf32>
    %cst_14 = arith.constant 0.000000e+00 : f32
    %19 = vector.broadcast %cst_14 : f32 to vector<8x32xf32>
    %20 = arith.maximumf %18, %19 : vector<8x32xf32>
    %21 = vector.broadcast %3 : vector<1x32xf32> to vector<8x32xf32>
    %22 = arith.mulf %20, %21 : vector<8x32xf32>
    %cst_15 = arith.constant dense<0.000000e+00> : vector<8xf32>
    %23 = vector.multi_reduction <add>, %22, %cst_15 [1] : vector<8x32xf32> to vector<8xf32>
    %24 = vector.shape_cast %23 : vector<8xf32> to vector<8x1xf32>
    %25 = vector.extract_strided_slice %6 {offsets = [0, 0], sizes = [1, 1], strides = [1, 1]} : vector<1x32xf32> to vector<1x1xf32>
    %26 = vector.broadcast %25 : vector<1x1xf32> to vector<8x1xf32>
    %27 = arith.addf %24, %26 : vector<8x1xf32>
    %c0_16 = arith.constant 0 : index
    %c0_17 = arith.constant 0 : index
    %28 = vector.load %arg4[%c0_16, %c0_17] : memref<8x1xf32, #tpu.memory_space<vmem>>, vector<8x1xf32>
    tpu.vector_store %arg4[%c0_16, %c0_17], %27 {strides = array<i32>} : memref<8x1xf32, #tpu.memory_space<vmem>>, vector<8x1xf32>,
    return
  }
  func.func @transform_0(%arg0: i32) -> (i32, i32) {
    %c0_i32 = arith.constant 0 : i32
    %c0_i32_0 = arith.constant 0 : i32
    return %arg0, %c0_i32 : i32, i32
  }
  func.func @transform_1(%arg0: i32) -> (i32, i32) {
    %c0_i32 = arith.constant 0 : i32
    %c0_i32_0 = arith.constant 0 : i32
    return %arg0, %c0_i32 : i32, i32
  }
  func.func @transform_2(%arg0: i32) -> (i32, i32) {
    %c0_i32 = arith.constant 0 : i32
    %c0_i32_0 = arith.constant 0 : i32
    %c0_i32_1 = arith.constant 0 : i32
    return %c0_i32, %c0_i32_0 : i32, i32
  }
  func.func @transform_3(%arg0: i32) -> (i32, i32) {
    %c0_i32 = arith.constant 0 : i32
    %c0_i32_0 = arith.constant 0 : i32
    return %arg0, %c0_i32 : i32, i32
  }
}

</mosaic_0001>

<llo_original>
// kernel: critic_forward.1
$region0: #{critic_forward.1}
  #allocation0 [shape = 'u32[]', space=smem, size = 0x4, offset = 0x4, fixed_abs, tag = 'smem constant byte address 0x4 - core index']
  #allocation1 [shape = 'u32[72,128]{1,0:T(1,128)}', space=vmem, size = 0x9000, scoped, tag = 'internal scratch']
  %s0 = inlined_call_operand.vmem [shape: f32[8,12], index: 0, kind: input, shape index: {}]
  %s1 = inlined_call_operand.vmem [shape: f32[8,4], index: 1, kind: input, shape index: {}]
  %s2 = inlined_call_operand.vmem [shape: f32[64,32], index: 2, kind: input, shape index: {}]
  %s3 = inlined_call_operand.vmem [shape: f32[8,1], index: 3, kind: output, shape index: {}]
  %s4 = sld [smem:[#allocation0]]
  $region22: #{critic_forward.1} parent=0
    _
  %s6 = ssub.s32 1, %s4
  %s7 = scalar_select 0, %s6, %s4
  // Predicated region
  $region2: #{critic_forward.1} parent=0 // pred_check
    _
  $region3: #{critic_forward.1} parent=0 // pred_check_branch
    %9 = sbr.rel (0) target = $region5
  $region4: #{critic_forward.1} parent=0 // pred_region
    _
  $region5: #{critic_forward.1} parent=0 // pred_fallthru
    _
  // Predicated region
  $region6: #{critic_forward.1} parent=0 // pred_check
    _
  $region7: #{critic_forward.1} parent=0 // pred_check_branch
    %11 = sbr.rel (0) target = $region9
  $region8: #{critic_forward.1} parent=0 // pred_region
    _
  $region9: #{critic_forward.1} parent=0 // pred_fallthru
    _
  // Predicated region
  $region10: #{critic_forward.1} parent=0 // pred_check
    _
  $region11: #{critic_forward.1} parent=0 // pred_check_branch
    %13 = sbr.rel (0) target = $region13
  $region12: #{critic_forward.1} parent=0 // pred_region
    _
  $region13: #{critic_forward.1} parent=0 // pred_fallthru
    _
  %v14 = vld [vmem:[%s2] sm:$0xff]
  %v15 = vld [vmem:[%s2 + $0x8] sm:$0xf]
  %v16 = vld [vmem:[%s2 + $0x10] sm:$0xf]
  %v17 = vld [vmem:[%s2 + $0x18] sm:$0xff]
  %v18 = vld [vmem:[%s2 + $0x20] sm:$0xff]
  %v19 = vld [vmem:[%s2 + $0x28] sm:$0xff]
  %v20 = vld [vmem:[%s2 + $0x30] sm:$0xff]
  %v21 = vld [vmem:[%s2 + $0x38] sm:$0x1]
  %v22 = vld [vmem:[%s2 + $0x39] sm:$0x1]
  %v23 = vld [vmem:[%s2 + $0x3a] sm:$0x1]
  %v24 = vld [vmem:[%s2 + $0x3b] sm:$0x1]
  %v25 = vld [vmem:[%s0] sm:$0xff]
  %v26 = vld [vmem:[%s1] sm:$0xff]
  %vm27 = vcmask 31744
  %v29 = vsel %vm27, %v26, 0
  %vm31 = vcmask 1043456
  %v33 = vsel %vm31, %v16, 0
  %35 = vmatpush.msra.mxu0 0.0
  %36 = vmatpush.msra.mxu0 0.0
  %37 = vmatpush.msra.mxu0 0.0
  %38 = vmatpush.msra.mxu0 0.0
  %39 = vmatpush.msra.mxu0 0.0
  %40 = vmatpush.msra.mxu0 0.0
  %41 = vmatpush.msra.mxu0 0.0
  %42 = vmatpush.msra.mxu0 0.0
  %43 = vmatpush.msra.mxu0 0.0
  %44 = vmatpush.msra.mxu0 0.0
  %45 = vmatpush.msra.mxu0 0.0
  %46 = vmatpush.msra.mxu0 0.0
  %47 = vmatpush.msra.mxu0 0.0
  %48 = vmatpush.msra.mxu0 0.0
  %49 = vmatpush.msra.mxu0 0.0
  %50 = vmatpush.msra.mxu0 %v33
  %51 = vmatmul.f32.gmra.mxu0 %v29
  %v52 = vpop.f32.mrf.mxu0
  %v53 = vadd.f32 0.0, %v52
  %54 = vdwg.mxu0
  %vm55 = vcmask 97280
  %v57 = vsel %vm55, %v25, 0
  %v60 = vsel %vm31, %v15, 0
  %62 = vmatpush.msra.mxu0 0.0
  %63 = vmatpush.msra.mxu0 0.0
  %64 = vmatpush.msra.mxu0 0.0
  %65 = vmatpush.msra.mxu0 0.0
  %66 = vmatpush.msra.mxu0 0.0
  %67 = vmatpush.msra.mxu0 0.0
  %68 = vmatpush.msra.mxu0 0.0
  %69 = vmatpush.msra.mxu0 0.0
  %70 = vmatpush.msra.mxu0 0.0
  %71 = vmatpush.msra.mxu0 0.0
  %72 = vmatpush.msra.mxu0 0.0
  %73 = vmatpush.msra.mxu0 0.0
  %74 = vmatpush.msra.mxu0 0.0
  %75 = vmatpush.msra.mxu0 0.0
  %76 = vmatpush.msra.mxu0 %v60
  %77 = vmatpush.msra.mxu0 %v14
  %78 = vmatmul.f32.gmra.mxu0 %v57
  %v79 = vpop.f32.mrf.mxu0
  %v80 = vadd.f32 %v53, %v79
  %81 = vdwg.mxu0
  %v82 = vperm.slane %v22, 0
  %v83 = vadd.f32 %v80, %v82
  %v84 = vmax.f32 %v83, 0.0
  %v85 = vperm.slane %v23, 0
  %vm86 = vcmask 261120
  %v88 = vsel %vm86, %v84, 0
  %90 = vmatpush.msra.mxu0 0.0
  %91 = vmatpush.msra.mxu0 0.0
  %92 = vmatpush.msra.mxu0 0.0
  %93 = vmatpush.msra.mxu0 0.0
  %94 = vmatpush.msra.mxu0 0.0
  %95 = vmatpush.msra.mxu0 0.0
  %96 = vmatpush.msra.mxu0 0.0
  %97 = vmatpush.msra.mxu0 0.0
  %98 = vmatpush.msra.mxu0 0.0
  %99 = vmatpush.msra.mxu0 0.0
  %100 = vmatpush.msra.mxu0 0.0
  %101 = vmatpush.msra.mxu0 0.0
  %102 = vmatpush.msra.mxu0 %v20
  %103 = vmatpush.msra.mxu0 %v19
  %104 = vmatpush.msra.mxu0 %v18
  %105 = vmatpush.msra.mxu0 %v17
  %106 = vmatmul.f32.gmra.mxu0 %v88
  %v107 = vpop.f32.mrf.mxu0
  %v108 = vadd.f32 %v85, %v107
  %109 = vdwg.mxu0
  %v110 = vmax.f32 %v108, 0.0
  %v111 = vperm.slane %v21, 0
  %v112 = vmul.f32 %v110, %v111
  %v113 = vsel %vm86, %v112, 0.0
  %114 = vadd.xlane.f32.xlu0 %v113
  %v115 = vpop.xlane.xlu0 %114
  %v116 = vperm.slane %v24, 0
  %v117 = vadd.f32 %v115, %v116
  %vm118 = vcmask 7168
  %119 = vst.msk [vmem:[%s3] sm:$0xff] %vm118, %v117
  // Predicated region
  $region14: #{critic_forward.1} parent=0 // pred_check
    _
  $region15: #{critic_forward.1} parent=0 // pred_check_branch
    %121 = sbr.rel (0) target = $region17
  $region16: #{critic_forward.1} parent=0 // pred_region
    _
  $region17: #{critic_forward.1} parent=0 // pred_fallthru
    _
  // Predicated region
  $region18: #{critic_forward.1} parent=0 // pred_check
    _
  $region19: #{critic_forward.1} parent=0 // pred_check_branch
    %123 = sbr.rel (0) target = $region21
  $region20: #{critic_forward.1} parent=0 // pred_region
    _
  $region21: #{critic_forward.1} parent=0 // pred_fallthru
    _

</llo_original>
